<compile_context>
chip_gen: v7x
topology: tpu7x:2x2x1
jax: 0.10.0
libtpu: 0.0.40
codegen_flags: <defaults>
</compile_context>

<pallas_src>
import jax
import jax.numpy as jnp
from jax.experimental import pallas as pl
from jax.experimental.pallas import tpu as pltpu


def _identity_copy_kernel(v_ref, o_ref, sem):
    # Single whole-array HBM->HBM DMA.  The DMA engines move the bytes at
    # full rate; nothing is staged through VMEM or vregs.
    cp = pltpu.make_async_copy(v_ref, o_ref, sem)
    cp.start()
    cp.wait()


def identity_encoding(v, alpha=None):
    """IdentityEncoding.forward(v, alpha) -> v.

    The op requires zero data movement, so the fastest correct implementation
    on every TPU generation is to return the input unchanged (no kernel
    launch, no HBM traffic).
    """
    del alpha  # unused, matches the PyTorch module's signature
    return v


def identity_encoding_materialize(v, alpha=None):
    """Variant that forces a fresh output buffer via a Pallas kernel.

    Only for callers that explicitly need a new array (e.g. downstream
    in-place / donation patterns).  Implemented as one HBM-level async copy:
    works for any shape/dtype without lane-masking or VMEM pressure.
    """
    del alpha
    v = jnp.asarray(v)
    if v.size == 0:
        return v

    itemsize = jnp.dtype(v.dtype).itemsize
    return pl.pallas_call(
        _identity_copy_kernel,
        out_shape=jax.ShapeDtypeStruct(v.shape, v.dtype),
        in_specs=[pl.BlockSpec(memory_space=pl.ANY)],
        out_specs=pl.BlockSpec(memory_space=pl.ANY),
        scratch_shapes=[pltpu.SemaphoreType.DMA],
        cost_estimate=pl.CostEstimate(
            flops=0,
            transcendentals=0,
            bytes_accessed=2 * v.size * itemsize,
        ),
    )(v)


if __name__ == "__main__":
    key = jax.random.PRNGKey(0)
    k1, k2, k3 = jax.random.split(key, 3)

    # 1) Module-consistent small input (batch=8, input_size=32): forward pass
    #    is the zero-cost bypass (returns the input array itself).
    v_small = jax.random.normal(k1, (8, 32), dtype=jnp.float32)
    out_small = jax.block_until_ready(identity_encoding(v_small))
    assert out_small.shape == v_small.shape and out_small.dtype == v_small.dtype
    assert bool(jnp.all(out_small == v_small))

    # 2) Materializing Pallas path on a lane-friendly shape: exercises the
    #    single HBM->HBM DMA kernel.
    v_big = jax.random.normal(k2, (128, 256), dtype=jnp.float32)
    out_big = jax.block_until_ready(identity_encoding_materialize(v_big))
    assert out_big.shape == v_big.shape and out_big.dtype == v_big.dtype
    assert bool(jnp.all(out_big == v_big))

    # 3) Materializing Pallas path on an odd shape: no alignment needed since
    #    the copy never goes through VMEM/BlockSpec tiling (no masked stores).
    v_odd = jax.random.normal(k3, (17, 5), dtype=jnp.float32)
    out_odd = jax.block_until_ready(identity_encoding_materialize(v_odd))
    assert out_odd.shape == v_odd.shape and out_odd.dtype == v_odd.dtype
    assert bool(jnp.all(out_odd == v_odd))

    print("KERNEL_OK")
</pallas_src>

<mosaic_0001>
module attributes {stable_mosaic.version = 11 : i64} {
  func.func @_identity_copy_kernel(%arg0: memref<128x256xf32, #tpu.memory_space<any>>, %arg1: memref<128x256xf32, #tpu.memory_space<any>>, %arg2: memref<!tpu.dma_semaphore, #tpu.memory_space<semaphore_mem>>) attributes {dimension_semantics = [], scalar_prefetch = 0 : i64, scratch_operands = 1 : i64, tpu.core_type = #tpu.core_type<tc>} {
    tpu.enqueue_dma source(%arg0 : memref<128x256xf32, #tpu.memory_space<any>>) target(%arg1 : memref<128x256xf32, #tpu.memory_space<any>>) target_semaphore(%arg2 : memref<!tpu.dma_semaphore, #tpu.memory_space<semaphore_mem>>)
    tpu.wait_dma2 semaphore(%arg2 : memref<!tpu.dma_semaphore, #tpu.memory_space<semaphore_mem>>) src(%arg0 : memref<128x256xf32, #tpu.memory_space<any>>) dst(%arg1 : memref<128x256xf32, #tpu.memory_space<any>>)
    return
  }
}

</mosaic_0001>

<llo_original>
// kernel: tpu_custom_call.1
$region0: #{tpu_custom_call.1}
  #allocation0 [shape = 'u32[]', space=smem, size = 0x4, offset = 0x4, fixed_abs, tag = 'smem constant byte address 0x4 - core index']
  #allocation1 [shape = 'u32[144,128]{1,0:T(1,128)}', space=vmem, size = 0x12000, scoped, tag = 'internal scratch']
  #allocation2 [shape = 's32[1]{0}', space=sflag, size = 0x4, scoped, tag = 'scratch operand']
  #allocation3 [shape = 's32[]', space=sflag, size = 0x4, offset = 0, fixed_abs, tag = 'sflag constant byte address 0x0 - dummy sync flag']
  #allocation4 [shape = 'u32[0]{0}', space=smem, size = 0, offset = 0, fixed_abs, tag = 'smem constant byte address 0x0 - null']
  %s0 = inlined_call_operand.hbm [shape: f32[128,256], index: 0, kind: input, shape index: {}]
  %s1 = inlined_call_operand.hbm [shape: f32[128,256], index: 1, kind: output, shape index: {}]
  %s2 = sld [smem:[#allocation0]]
  $region2: #{tpu_custom_call.1} parent=0
    _
  %s4 = ssub.s32 1, %s2
  %s5 = scalar_select 0, %s4, %s2
  %s7 = sshll.u32 1, 14
  %s8 = sxor.u32 4294967295, %s7
  %s11 = sshll.u32 3, 24
  %s12 = sxor.u32 4294967295, %s11
  %s13 = sand.u32 0, %s12
  %s15 = sor.u32 %s13, 0
  %18 = dma.general %s0, 4096, %s1, [#allocation2], [#allocation3], [#allocation4], %s15, 0
  %s19 = smul.u32 8, 16
  %s20 = smul.u32 %s19, 2
  %s21 = sshll.u32 %s20, 4
  %22 = dma.done [#allocation2], %s21
  %23 = vsyncmov [#allocation2]
  %s24 = vpop.sfrf %23
  %p25 = scmp.eq.s32.totalorder %s24, 0
  %p26 = pneg %p25
  %28 = shalt.err (%p26)

</llo_original>
